<compile_context>
chip_gen: v7x
topology: tpu7x:2x2x1
jax: 0.10.0
libtpu: 0.0.40
codegen_flags: <defaults>
</compile_context>

<pallas_src>
import functools

import jax
import jax.numpy as jnp
from jax.experimental import pallas as pl
from jax.experimental.pallas import tpu as pltpu


def fm_interaction_kernel(x_ref, o_ref, *, num_field: int, embed_dim: int):
    # x_ref: (TB, F*D) lane-dense tile in VMEM ; o_ref: (TB, 1)
    x = x_ref[...].astype(jnp.float32)                     # (TB, F*D)

    # Field sum as a balanced add tree -> (TB, D).  (A roll-and-add tree or an
    # MXU stacked-identity dot would also work for unaligned D; with MiB-scale
    # tiles this VPU/XLU work is fully hidden under the HBM DMA.)
    parts = [x[:, f * embed_dim:(f + 1) * embed_dim] for f in range(num_field)]
    while len(parts) > 1:
        nxt = [parts[i] + parts[i + 1] for i in range(0, len(parts) - 1, 2)]
        if len(parts) % 2:
            nxt.append(parts[-1])
        parts = nxt
    s = parts[0]                                            # (TB, D)

    # Fused reductions: sum((sum_f x)^2 over D) - sum(x^2 over F and D).
    sq_of_sum = jnp.sum(s * s, axis=-1, keepdims=True)      # (TB, 1)
    sum_of_sq = jnp.sum(x * x, axis=-1, keepdims=True)      # (TB, 1)
    o_ref[...] = (0.5 * (sq_of_sum - sum_of_sq)).astype(o_ref.dtype)


def _vmem_budget() -> tuple[int, int]:
    """(per-input-buffer byte target, vmem_limit_bytes), generation-gated."""
    cap = 64 << 20                      # conservative fallback (v7x per-TC VMEM)
    try:
        cap = int(pltpu.get_tpu_info().vmem_capacity_bytes)
    except Exception:
        pass
    if cap >= (128 << 20):
        # v5e / v6e: a single TensorCore owns the full 128 MiB.
        return 8 << 20, 64 << 20
    # v7x: 64 MiB physical per TC; keep double-buffered input at ~12 MiB.
    return 6 << 20, 32 << 20


def _choose_tiling(batch: int, fd: int, itemsize: int,
                   per_buf_bytes: int) -> tuple[int, int, int]:
    """Pick (batch_tile, grid_steps, padded_batch).

    Tile is sized purely by the VMEM budget; the grid is forced to an even
    step count >= 2 so v7x's two TensorCores split the 'parallel' axis evenly.
    """
    row_bytes = pl.cdiv(fd, 128) * 128 * itemsize           # lane-padded row
    max_tile = max(8, ((per_buf_bytes // row_bytes) // 8) * 8)
    b8 = pl.cdiv(batch, 8) * 8                              # sublane multiple
    steps = max(2, pl.cdiv(b8, max_tile))
    if steps % 2:
        steps += 1
    tile = pl.cdiv(b8, steps * 8) * 8                       # <= max_tile
    return tile, steps, tile * steps


def fm_interaction(x: jax.Array, *, batch_tile: int | None = None) -> jax.Array:
    """FM second-order interaction. x: (B, F, D) -> (B, 1) in x.dtype."""
    B, F, D = x.shape
    FD = F * D
    x2 = x.reshape(B, FD)                                   # contiguous: free

    per_buf, vmem_limit = _vmem_budget()
    if batch_tile is None:
        tile, steps, padded_B = _choose_tiling(B, FD, x2.dtype.itemsize, per_buf)
    else:
        tile = max(8, pl.cdiv(batch_tile, 8) * 8)
        steps = pl.cdiv(B, tile)
        padded_B = steps * tile

    if padded_B != B:
        # Zero rows produce exactly 0 for the FM term; sliced off below.
        x2 = jnp.pad(x2, ((0, padded_B - B), (0, 0)))

    kernel = functools.partial(fm_interaction_kernel, num_field=F, embed_dim=D)
    out_dtype = x.dtype
    cost = pl.CostEstimate(
        flops=3 * padded_B * FD,
        transcendentals=0,
        bytes_accessed=padded_B * FD * x2.dtype.itemsize
        + padded_B * jnp.dtype(out_dtype).itemsize,
    )

    out = pl.pallas_call(
        kernel,
        out_shape=jax.ShapeDtypeStruct((padded_B, 1), out_dtype),
        grid_spec=pltpu.PrefetchScalarGridSpec(
            num_scalar_prefetch=0,
            grid=(steps,),
            in_specs=[pl.BlockSpec((tile, FD), lambda i: (i, 0))],
            out_specs=pl.BlockSpec((tile, 1), lambda i: (i, 0)),
        ),
        compiler_params=pltpu.CompilerParams(
            dimension_semantics=("parallel",),
            vmem_limit_bytes=vmem_limit,
        ),
        cost_estimate=cost,
    )(x2)
    return out[:B] if padded_B != B else out


def _reference(x: jax.Array) -> jax.Array:
    xf = x.astype(jnp.float32)
    s = jnp.sum(xf, axis=1)
    return 0.5 * jnp.sum(s * s - jnp.sum(xf * xf, axis=1), axis=1, keepdims=True)


if __name__ == "__main__":
    key = jax.random.PRNGKey(0)

    # Case 1: lane-dense F*D == 128, batch not a multiple of the chosen tile
    # (exercises the zero-pad / slice path and the even 2-step grid).
    B1, F1, D1 = 200, 4, 32
    x1 = jax.random.normal(key, (B1, F1, D1), dtype=jnp.float32)
    out1 = jax.block_until_ready(fm_interaction(x1))
    ref1 = _reference(x1)
    assert out1.shape == (B1, 1)
    assert jnp.allclose(out1.astype(jnp.float32), ref1, atol=1e-3, rtol=1e-5)

    # Case 2: odd field count, F*D < 128, batch not a multiple of 8.
    B2, F2, D2 = 37, 5, 24
    k2 = jax.random.fold_in(key, 1)
    x2 = jax.random.normal(k2, (B2, F2, D2), dtype=jnp.float32)
    out2 = jax.block_until_ready(fm_interaction(x2))
    ref2 = _reference(x2)
    assert out2.shape == (B2, 1)
    assert jnp.allclose(out2.astype(jnp.float32), ref2, atol=1e-3, rtol=1e-5)

    print("KERNEL_OK")
</pallas_src>

<mosaic_0001>
module attributes {stable_mosaic.version = 11 : i64} {
  func.func @fm_interaction_kernel(%arg0: i32, %arg1: memref<104x128xf32, #tpu.memory_space<vmem>>, %arg2: memref<104x1xf32, #tpu.memory_space<vmem>>) attributes {dimension_semantics = [#tpu.dimension_semantics<parallel>], iteration_bounds = array<i64: 2>, scalar_prefetch = 0 : i64, scratch_operands = 0 : i64, tpu.core_type = #tpu.core_type<tc>, window_params = [{transform_indices = @transform_0, window_bounds = array<i64: 104, 128>}, {transform_indices = @transform_1, window_bounds = array<i64: 104, 1>}]} {
    %c0 = arith.constant 0 : index
    %c0_0 = arith.constant 0 : index
    %0 = vector.load %arg1[%c0, %c0_0] : memref<104x128xf32, #tpu.memory_space<vmem>>, vector<104x128xf32>
    %1 = vector.extract_strided_slice %0 {offsets = [0, 0], sizes = [104, 32], strides = [1, 1]} : vector<104x128xf32> to vector<104x32xf32>
    %2 = vector.extract_strided_slice %0 {offsets = [0, 32], sizes = [104, 32], strides = [1, 1]} : vector<104x128xf32> to vector<104x32xf32>
    %3 = vector.extract_strided_slice %0 {offsets = [0, 64], sizes = [104, 32], strides = [1, 1]} : vector<104x128xf32> to vector<104x32xf32>
    %4 = vector.extract_strided_slice %0 {offsets = [0, 96], sizes = [104, 32], strides = [1, 1]} : vector<104x128xf32> to vector<104x32xf32>
    %5 = arith.addf %1, %2 : vector<104x32xf32>
    %6 = arith.addf %3, %4 : vector<104x32xf32>
    %7 = arith.addf %5, %6 : vector<104x32xf32>
    %8 = arith.mulf %7, %7 : vector<104x32xf32>
    %cst = arith.constant dense<0.000000e+00> : vector<104xf32>
    %9 = vector.multi_reduction <add>, %8, %cst [1] : vector<104x32xf32> to vector<104xf32>
    %10 = vector.shape_cast %9 : vector<104xf32> to vector<104x1xf32>
    %11 = arith.mulf %0, %0 : vector<104x128xf32>
    %cst_1 = arith.constant dense<0.000000e+00> : vector<104xf32>
    %12 = vector.multi_reduction <add>, %11, %cst_1 [1] : vector<104x128xf32> to vector<104xf32>
    %13 = vector.shape_cast %12 : vector<104xf32> to vector<104x1xf32>
    %14 = arith.subf %10, %13 : vector<104x1xf32>
    %cst_2 = arith.constant 5.000000e-01 : f32
    %15 = vector.broadcast %cst_2 : f32 to vector<104x1xf32>
    %16 = arith.mulf %15, %14 : vector<104x1xf32>
    %c0_3 = arith.constant 0 : index
    %c0_4 = arith.constant 0 : index
    %17 = vector.load %arg2[%c0_3, %c0_4] : memref<104x1xf32, #tpu.memory_space<vmem>>, vector<104x1xf32>
    tpu.vector_store %arg2[%c0_3, %c0_4], %16 {strides = array<i32>} : memref<104x1xf32, #tpu.memory_space<vmem>>, vector<104x1xf32>,
    return
  }
  func.func @transform_0(%arg0: i32) -> (i32, i32) {
    %c0_i32 = arith.constant 0 : i32
    %c0_i32_0 = arith.constant 0 : i32
    return %arg0, %c0_i32 : i32, i32
  }
  func.func @transform_1(%arg0: i32) -> (i32, i32) {
    %c0_i32 = arith.constant 0 : i32
    %c0_i32_0 = arith.constant 0 : i32
    return %arg0, %c0_i32 : i32, i32
  }
}

</mosaic_0001>

<llo_original>
// kernel: tpu_custom_call.1
$region0: #{tpu_custom_call.1}
  #allocation0 [shape = 'u32[]', space=smem, size = 0x4, offset = 0x4, fixed_abs, tag = 'smem constant byte address 0x4 - core index']
  #allocation1 [shape = 'u32[144,128]{1,0:T(1,128)}', space=vmem, size = 0x12000, scoped, tag = 'internal scratch']
  %s0 = inlined_call_operand.hbm [shape: f32[208,128], index: 0, kind: input, shape index: {}]
  %s1 = inlined_call_operand.vmem [shape: f32[208,1], index: 1, kind: output, shape index: {}]
  %s2 = sld [smem:[#allocation0]]
  $region41: #{tpu_custom_call.1} parent=0
    _
  %s4 = ssub.s32 1, %s2
  %s5 = scalar_select 0, %s4, %s2
  $region1: #{tpu_custom_call.1} parent=0
    #allocation2 [shape = 'u8[106496]{0}', space=vmem, size = 0x1a000, scoped, tag = 'input window, operand 0']
    #allocation3 [shape = 's32[2]{0}', space=sflag, size = 0x8, scoped, tag = 'scoped memory for tpu_custom_call.1']
    %6 = vsyncpa [#allocation3], 0
    %s7 = scalar_lea.sflag [#allocation3], 1
    %8 = vsyncpa %s7, 0
    loop: start=0, step=1, limit=4
    $region2: #{tpu_custom_call.1} parent=1 // loop_pre_header
      _
    $region3: #{tpu_custom_call.1} parent=1 // loop_header
      %s10 = sphi 0, %s14
      %p11 = scmp.ge.s32.totalorder %s10, 4
      %s20 = sphi 0, %s22
      %s23 = sphi 0, %s20
      %s24 = sphi 0, %s23
      %s40 = sphi 0, %s24
      %s46 = sphi 0, %s48
      %s49 = sphi 0, %s46
      %s50 = sphi 0, %s49
      %s66 = sphi 0, %s50
    $region4: #{tpu_custom_call.1} parent=1 // loop_header_branch
      %13 = sbr.rel (%p11) target = $region8
    $region5: #{tpu_custom_call.1} parent=1 // loop_body
      %s15 = ssub.s32 %s10, 1
      %s16 = ssub.s32 %s10, 2
      %s17 = sadd.s32 %s10, 1
      %s18 = ssub.s32 %s10, %s17
      %p19 = scmp.eq.s32.totalorder %s18, 0
      %s21 = sadd.s32 %s20, 1
      %s22 = scalar_select %p19, %s20, %s21
      %p25 = pneg %p19
      %p26 = scmp.eq.s32.totalorder %s10, 1
      %p27 = por %p25, %p26
      %p28 = scmp.ne.s32.totalorder %s20, %s23
      %p29 = scmp.eq.s32.totalorder %s10, 0
      %p30 = por %p28, %p29
      %p31 = scmp.ne.s32.totalorder %s20, %s23
      %p32 = scmp.eq.s32.totalorder %s15, 1
      %p33 = por %p31, %p32
      %p34 = scmp.ne.s32.totalorder %s23, %s24
      %p35 = scmp.eq.s32.totalorder %s15, 0
      %p36 = por %p34, %p35
      %p37 = scmp.ne.s32.totalorder %s23, %s24
      %p38 = scmp.eq.s32.totalorder %s16, 1
      %p39 = por %p37, %p38
      %p41 = scmp.ne.s32.totalorder %s24, %s40
      %p42 = scmp.eq.s32.totalorder %s16, 0
      %p43 = por %p41, %p42
      %s44 = ssub.s32 %s10, %s17
      %p45 = scmp.eq.s32.totalorder %s44, 0
      %s47 = sadd.s32 %s46, 1
      %s48 = scalar_select %p45, %s46, %s47
      %p51 = pneg %p45
      %p52 = scmp.eq.s32.totalorder %s10, 1
      %p53 = por %p51, %p52
      %p54 = scmp.ne.s32.totalorder %s46, %s49
      %p55 = scmp.eq.s32.totalorder %s10, 0
      %p56 = por %p54, %p55
      %p57 = scmp.ne.s32.totalorder %s46, %s49
      %p58 = scmp.eq.s32.totalorder %s15, 1
      %p59 = por %p57, %p58
      %p60 = scmp.ne.s32.totalorder %s49, %s50
      %p61 = scmp.eq.s32.totalorder %s15, 0
      %p62 = por %p60, %p61
      %p63 = scmp.ne.s32.totalorder %s49, %s50
      %p64 = scmp.eq.s32.totalorder %s16, 1
      %p65 = por %p63, %p64
      %p67 = scmp.ne.s32.totalorder %s50, %s66
      %p68 = scmp.eq.s32.totalorder %s16, 0
      %p69 = por %p67, %p68
      %p70 = scmp.le.s32.totalorder 1, %s10
      %p71 = scmp.lt.s32.totalorder %s10, 3
      %p72 = pnand %p70, %p71
      %p73 = pneg %p72
      // Predicated region
      $region9: #{tpu_custom_call.1} parent=5 // pred_check
        _
      $region10: #{tpu_custom_call.1} parent=5 // pred_check_branch
        %75 = sbr.rel (%p72) target = $region12
      $region11: #{tpu_custom_call.1} parent=5 // pred_region
        %s76 = ssub.s32 %s10, 1
      $region12: #{tpu_custom_call.1} parent=5 // pred_fallthru
        _
      %p77 = scmp.lt.s32.totalorder %s10, 2
      // Predicated region
      $region13: #{tpu_custom_call.1} parent=5 // pred_check
        %p78 = pneg %p77
      $region14: #{tpu_custom_call.1} parent=5 // pred_check_branch
        %80 = sbr.rel (%p78) target = $region16
      $region15: #{tpu_custom_call.1} parent=5 // pred_region
        // Predicated region
        $region17: #{tpu_custom_call.1} parent=15 // pred_check
          %p81 = pneg %p30
        $region18: #{tpu_custom_call.1} parent=15 // pred_check_branch
          %83 = sbr.rel (%p81) target = $region20
        $region19: #{tpu_custom_call.1} parent=15 // pred_region
          %s84 = sand.u32 %s20, 1
          %s85 = scalar_lea.sflag [#allocation3], %s84
          %s86 = sand.u32 %s20, 1
          %s87 = smul.addr %s86, 104
          %s88 = scalar_lea.vmem [#allocation2], %s87
          %s89 = smul.u32 13, %s10
          %s91 = ssub.s32 1664, 1664
          %92 = vsyncadd %s85, %s91
          %s93 = smul.addr %s89, 128
          %s94 = scalar_lea.hbm %s0, %s93
          %s95 = sshll.u32 %s88, 4
          %s96 = int_to_ptr.vmem [resolvable:$true] %s95
          %101 = dma.hbm_to_vmem [thread:$0]  %s94, 1664, %s96, %s85, 128, 128, 8
        $region20: #{tpu_custom_call.1} parent=15 // pred_fallthru
          _
      $region16: #{tpu_custom_call.1} parent=5 // pred_fallthru
        _
      %p102 = scmp.le.s32.totalorder 1, %s10
      %p103 = scmp.lt.s32.totalorder %s10, 3
      %p104 = pnand %p102, %p103
      %p105 = pneg %p104
      // Predicated region
      $region21: #{tpu_custom_call.1} parent=5 // pred_check
        _
      $region22: #{tpu_custom_call.1} parent=5 // pred_check_branch
        %107 = sbr.rel (%p104) target = $region24
      $region23: #{tpu_custom_call.1} parent=5 // pred_region
        %s108 = ssub.s32 %s10, 1
        %s109 = sand.u32 %s23, 1
        %s110 = scalar_lea.sflag [#allocation3], %s109
        %s111 = sand.u32 %s23, 1
        %s112 = smul.addr %s111, 104
        %s113 = scalar_lea.vmem [#allocation2], %s112
        // Predicated region
        $region25: #{tpu_custom_call.1} parent=23 // pred_check
          %p114 = pneg %p36
        $region26: #{tpu_custom_call.1} parent=23 // pred_check_branch
          %116 = sbr.rel (%p114) target = $region28
        $region27: #{tpu_custom_call.1} parent=23 // pred_region
          %117 = dma.done %s110, 1664
        $region28: #{tpu_custom_call.1} parent=23 // pred_fallthru
          _
        %s118 = sand.u32 %s23, 1
        %s119 = scalar_lea.sflag [#allocation3], %s118
        %s120 = sand.u32 %s23, 1
        %s121 = smul.addr %s120, 104
        %s122 = scalar_lea.vmem [#allocation2], %s121
        %p123 = pneg %p36
        %p124 = pneg %p33
        %p125 = pneg %p62
        %p126 = pneg %p59
        %s127 = smul.u32 13, %s15
        %p128 = scmp.lt.s32.totalorder %s127, 25
        %s129 = scalar_select %p128, %s127, 25
        %s130 = smul.addr %s129, 8
        %s131 = scalar_lea.vmem %s1, %s130
        %s132 = smul.u32 13, %s15
        %s133 = smul.u32 13, %s15
        %p134 = scmp.lt.s32.totalorder %s133, 25
        %s135 = scalar_select %p134, %s133, 25
        %s136 = smul.addr %s135, 8
        %s137 = scalar_lea.vmem %s1, %s136
        %s138 = smul.u32 13, %s15
        %v139 = vld [vmem:[%s113] sm:$0xff]
        %v140 = vld [vmem:[%s113 + $0x8] sm:$0xff]
        %v141 = vld [vmem:[%s113 + $0x10] sm:$0xff]
        %v142 = vld [vmem:[%s113 + $0x18] sm:$0xff]
        %v143 = vld [vmem:[%s113 + $0x20] sm:$0xff]
        %v144 = vld [vmem:[%s113 + $0x28] sm:$0xff]
        %v145 = vld [vmem:[%s113 + $0x30] sm:$0xff]
        %v146 = vld [vmem:[%s113 + $0x38] sm:$0xff]
        %v147 = vld [vmem:[%s113 + $0x40] sm:$0xff]
        %v148 = vld [vmem:[%s113 + $0x48] sm:$0xff]
        %v149 = vld [vmem:[%s113 + $0x50] sm:$0xff]
        %v150 = vld [vmem:[%s113 + $0x58] sm:$0xff]
        %v151 = vld [vmem:[%s113 + $0x60] sm:$0xff]
        %165 = vrot.lane.b32.xlu0 %v139, 96
        %v166 = vpop.permute.xlu0 %165
        %167 = vrot.lane.b32.xlu0 %v140, 96
        %v168 = vpop.permute.xlu0 %167
        %169 = vrot.lane.b32.xlu0 %v141, 96
        %v170 = vpop.permute.xlu0 %169
        %171 = vrot.lane.b32.xlu0 %v142, 96
        %v172 = vpop.permute.xlu0 %171
        %173 = vrot.lane.b32.xlu0 %v143, 96
        %v174 = vpop.permute.xlu0 %173
        %175 = vrot.lane.b32.xlu0 %v144, 96
        %v176 = vpop.permute.xlu0 %175
        %177 = vrot.lane.b32.xlu0 %v145, 96
        %v178 = vpop.permute.xlu0 %177
        %179 = vrot.lane.b32.xlu0 %v146, 96
        %v180 = vpop.permute.xlu0 %179
        %181 = vrot.lane.b32.xlu0 %v147, 96
        %v182 = vpop.permute.xlu0 %181
        %183 = vrot.lane.b32.xlu0 %v148, 96
        %v184 = vpop.permute.xlu0 %183
        %185 = vrot.lane.b32.xlu0 %v149, 96
        %v186 = vpop.permute.xlu0 %185
        %187 = vrot.lane.b32.xlu0 %v150, 96
        %v188 = vpop.permute.xlu0 %187
        %189 = vrot.lane.b32.xlu0 %v151, 96
        %v190 = vpop.permute.xlu0 %189
        %v204 = vadd.f32 %v139, %v166
        %v205 = vadd.f32 %v140, %v168
        %v206 = vadd.f32 %v141, %v170
        %v207 = vadd.f32 %v142, %v172
        %v208 = vadd.f32 %v143, %v174
        %v209 = vadd.f32 %v144, %v176
        %v210 = vadd.f32 %v145, %v178
        %v211 = vadd.f32 %v146, %v180
        %v212 = vadd.f32 %v147, %v182
        %v213 = vadd.f32 %v148, %v184
        %v214 = vadd.f32 %v149, %v186
        %v215 = vadd.f32 %v150, %v188
        %v216 = vadd.f32 %v151, %v190
        %230 = vrot.lane.b32.xlu0 %v204, 64
        %v231 = vpop.permute.xlu0 %230
        %232 = vrot.lane.b32.xlu0 %v205, 64
        %v233 = vpop.permute.xlu0 %232
        %234 = vrot.lane.b32.xlu0 %v206, 64
        %v235 = vpop.permute.xlu0 %234
        %236 = vrot.lane.b32.xlu0 %v207, 64
        %v237 = vpop.permute.xlu0 %236
        %238 = vrot.lane.b32.xlu0 %v208, 64
        %v239 = vpop.permute.xlu0 %238
        %240 = vrot.lane.b32.xlu0 %v209, 64
        %v241 = vpop.permute.xlu0 %240
        %242 = vrot.lane.b32.xlu0 %v210, 64
        %v243 = vpop.permute.xlu0 %242
        %244 = vrot.lane.b32.xlu0 %v211, 64
        %v245 = vpop.permute.xlu0 %244
        %246 = vrot.lane.b32.xlu0 %v212, 64
        %v247 = vpop.permute.xlu0 %246
        %248 = vrot.lane.b32.xlu0 %v213, 64
        %v249 = vpop.permute.xlu0 %248
        %250 = vrot.lane.b32.xlu0 %v214, 64
        %v251 = vpop.permute.xlu0 %250
        %252 = vrot.lane.b32.xlu0 %v215, 64
        %v253 = vpop.permute.xlu0 %252
        %254 = vrot.lane.b32.xlu0 %v216, 64
        %v255 = vpop.permute.xlu0 %254
        %v269 = vadd.f32 %v204, %v231
        %v270 = vadd.f32 %v205, %v233
        %v271 = vadd.f32 %v206, %v235
        %v272 = vadd.f32 %v207, %v237
        %v273 = vadd.f32 %v208, %v239
        %v274 = vadd.f32 %v209, %v241
        %v275 = vadd.f32 %v210, %v243
        %v276 = vadd.f32 %v211, %v245
        %v277 = vadd.f32 %v212, %v247
        %v278 = vadd.f32 %v213, %v249
        %v279 = vadd.f32 %v214, %v251
        %v280 = vadd.f32 %v215, %v253
        %v281 = vadd.f32 %v216, %v255
        %v282 = vmul.f32 %v269, %v269
        %v283 = vmul.f32 %v270, %v270
        %v284 = vmul.f32 %v271, %v271
        %v285 = vmul.f32 %v272, %v272
        %v286 = vmul.f32 %v273, %v273
        %v287 = vmul.f32 %v274, %v274
        %v288 = vmul.f32 %v275, %v275
        %v289 = vmul.f32 %v276, %v276
        %v290 = vmul.f32 %v277, %v277
        %v291 = vmul.f32 %v278, %v278
        %v292 = vmul.f32 %v279, %v279
        %v293 = vmul.f32 %v280, %v280
        %v294 = vmul.f32 %v281, %v281
        %vm295 = vcmask 261120
        %v296 = vsel %vm295, %v282, 0.0
        %297 = vadd.xlane.f32.xlu0 %v296
        %v298 = vpop.xlane.xlu0 %297
        %v299 = vsel %vm295, %v283, 0.0
        %300 = vadd.xlane.f32.xlu0 %v299
        %v301 = vpop.xlane.xlu0 %300
        %v302 = vsel %vm295, %v284, 0.0
        %303 = vadd.xlane.f32.xlu0 %v302
        %v304 = vpop.xlane.xlu0 %303
        %v305 = vsel %vm295, %v285, 0.0
        %306 = vadd.xlane.f32.xlu0 %v305
        %v307 = vpop.xlane.xlu0 %306
        %v308 = vsel %vm295, %v286, 0.0
        %309 = vadd.xlane.f32.xlu0 %v308
        %v310 = vpop.xlane.xlu0 %309
        %v311 = vsel %vm295, %v287, 0.0
        %312 = vadd.xlane.f32.xlu0 %v311
        %v313 = vpop.xlane.xlu0 %312
        %v314 = vsel %vm295, %v288, 0.0
        %315 = vadd.xlane.f32.xlu0 %v314
        %v316 = vpop.xlane.xlu0 %315
        %v317 = vsel %vm295, %v289, 0.0
        %318 = vadd.xlane.f32.xlu0 %v317
        %v319 = vpop.xlane.xlu0 %318
        %v320 = vsel %vm295, %v290, 0.0
        %321 = vadd.xlane.f32.xlu0 %v320
        %v322 = vpop.xlane.xlu0 %321
        %v323 = vsel %vm295, %v291, 0.0
        %324 = vadd.xlane.f32.xlu0 %v323
        %v325 = vpop.xlane.xlu0 %324
        %v326 = vsel %vm295, %v292, 0.0
        %327 = vadd.xlane.f32.xlu0 %v326
        %v328 = vpop.xlane.xlu0 %327
        %v329 = vsel %vm295, %v293, 0.0
        %330 = vadd.xlane.f32.xlu0 %v329
        %v331 = vpop.xlane.xlu0 %330
        %v332 = vsel %vm295, %v294, 0.0
        %333 = vadd.xlane.f32.xlu0 %v332
        %v334 = vpop.xlane.xlu0 %333
        %v335 = vmul.f32 %v139, %v139
        %v336 = vmul.f32 %v140, %v140
        %v337 = vmul.f32 %v141, %v141
        %v338 = vmul.f32 %v142, %v142
        %v339 = vmul.f32 %v143, %v143
        %v340 = vmul.f32 %v144, %v144
        %v341 = vmul.f32 %v145, %v145
        %v342 = vmul.f32 %v146, %v146
        %v343 = vmul.f32 %v147, %v147
        %v344 = vmul.f32 %v148, %v148
        %v345 = vmul.f32 %v149, %v149
        %v346 = vmul.f32 %v150, %v150
        %v347 = vmul.f32 %v151, %v151
        %348 = vadd.xlane.f32.xlu0 %v335
        %v349 = vpop.xlane.xlu0 %348
        %350 = vadd.xlane.f32.xlu0 %v336
        %v351 = vpop.xlane.xlu0 %350
        %352 = vadd.xlane.f32.xlu0 %v337
        %v353 = vpop.xlane.xlu0 %352
        %354 = vadd.xlane.f32.xlu0 %v338
        %v355 = vpop.xlane.xlu0 %354
        %356 = vadd.xlane.f32.xlu0 %v339
        %v357 = vpop.xlane.xlu0 %356
        %358 = vadd.xlane.f32.xlu0 %v340
        %v359 = vpop.xlane.xlu0 %358
        %360 = vadd.xlane.f32.xlu0 %v341
        %v361 = vpop.xlane.xlu0 %360
        %362 = vadd.xlane.f32.xlu0 %v342
        %v363 = vpop.xlane.xlu0 %362
        %364 = vadd.xlane.f32.xlu0 %v343
        %v365 = vpop.xlane.xlu0 %364
        %366 = vadd.xlane.f32.xlu0 %v344
        %v367 = vpop.xlane.xlu0 %366
        %368 = vadd.xlane.f32.xlu0 %v345
        %v369 = vpop.xlane.xlu0 %368
        %370 = vadd.xlane.f32.xlu0 %v346
        %v371 = vpop.xlane.xlu0 %370
        %372 = vadd.xlane.f32.xlu0 %v347
        %v373 = vpop.xlane.xlu0 %372
        %v374 = vsub.f32 %v298, %v349
        %v375 = vsub.f32 %v301, %v351
        %v376 = vsub.f32 %v304, %v353
        %v377 = vsub.f32 %v307, %v355
        %v378 = vsub.f32 %v310, %v357
        %v379 = vsub.f32 %v313, %v359
        %v380 = vsub.f32 %v316, %v361
        %v381 = vsub.f32 %v319, %v363
        %v382 = vsub.f32 %v322, %v365
        %v383 = vsub.f32 %v325, %v367
        %v384 = vsub.f32 %v328, %v369
        %v385 = vsub.f32 %v331, %v371
        %v386 = vsub.f32 %v334, %v373
        %v387 = vmul.f32 %v374, 0.5
        %v388 = vmul.f32 %v375, 0.5
        %v389 = vmul.f32 %v376, 0.5
        %v390 = vmul.f32 %v377, 0.5
        %v391 = vmul.f32 %v378, 0.5
        %v392 = vmul.f32 %v379, 0.5
        %v393 = vmul.f32 %v380, 0.5
        %v394 = vmul.f32 %v381, 0.5
        %v395 = vmul.f32 %v382, 0.5
        %v396 = vmul.f32 %v383, 0.5
        %v397 = vmul.f32 %v384, 0.5
        %v398 = vmul.f32 %v385, 0.5
        %v399 = vmul.f32 %v386, 0.5
        %vm400 = vcmask 7168
        %401 = vst.msk [vmem:[%s137] sm:$0xff] %vm400, %v387
        %402 = vst.msk [vmem:[%s137 + $0x8] sm:$0xff] %vm400, %v388
        %403 = vst.msk [vmem:[%s137 + $0x10] sm:$0xff] %vm400, %v389
        %404 = vst.msk [vmem:[%s137 + $0x18] sm:$0xff] %vm400, %v390
        %405 = vst.msk [vmem:[%s137 + $0x20] sm:$0xff] %vm400, %v391
        %406 = vst.msk [vmem:[%s137 + $0x28] sm:$0xff] %vm400, %v392
        %407 = vst.msk [vmem:[%s137 + $0x30] sm:$0xff] %vm400, %v393
        %408 = vst.msk [vmem:[%s137 + $0x38] sm:$0xff] %vm400, %v394
        %409 = vst.msk [vmem:[%s137 + $0x40] sm:$0xff] %vm400, %v395
        %410 = vst.msk [vmem:[%s137 + $0x48] sm:$0xff] %vm400, %v396
        %411 = vst.msk [vmem:[%s137 + $0x50] sm:$0xff] %vm400, %v397
        %412 = vst.msk [vmem:[%s137 + $0x58] sm:$0xff] %vm400, %v398
        %413 = vst.msk [vmem:[%s137 + $0x60] sm:$0xff] %vm400, %v399
        %s414 = smul.u32 13, %s15
        %p415 = scmp.lt.s32.totalorder %s414, 25
        %s416 = scalar_select %p415, %s414, 25
        %s417 = smul.addr %s416, 8
        %s418 = scalar_lea.vmem %s1, %s417
        // Predicated region
        $region29: #{tpu_custom_call.1} parent=23 // pred_check
          %p419 = pneg %p59
        $region30: #{tpu_custom_call.1} parent=23 // pred_check_branch
          %421 = sbr.rel (%p419) target = $region32
        $region31: #{tpu_custom_call.1} parent=23 // pred_region
          %s422 = smul.u32 13, %s15
        $region32: #{tpu_custom_call.1} parent=23 // pred_fallthru
          _
      $region24: #{tpu_custom_call.1} parent=5 // pred_fallthru
        _
      %p423 = scmp.le.s32.totalorder 2, %s10
      // Predicated region
      $region33: #{tpu_custom_call.1} parent=5 // pred_check
        %p424 = pneg %p423
      $region34: #{tpu_custom_call.1} parent=5 // pred_check_branch
        %426 = sbr.rel (%p424) target = $region36
      $region35: #{tpu_custom_call.1} parent=5 // pred_region
        %s427 = ssub.s32 %s10, 2
        // Predicated region
        $region37: #{tpu_custom_call.1} parent=35 // pred_check
          %p428 = pneg %p65
        $region38: #{tpu_custom_call.1} parent=35 // pred_check_branch
          %430 = sbr.rel (%p428) target = $region40
        $region39: #{tpu_custom_call.1} parent=35 // pred_region
          %s431 = smul.u32 13, %s16
          %p432 = scmp.lt.s32.totalorder %s431, 25
          %s433 = scalar_select %p432, %s431, 25
          %s434 = smul.addr %s433, 8
          %s435 = scalar_lea.vmem %s1, %s434
        $region40: #{tpu_custom_call.1} parent=35 // pred_fallthru
          _
      $region36: #{tpu_custom_call.1} parent=5 // pred_fallthru
        _
    $region6: #{tpu_custom_call.1} parent=1 // loop_footer
      %s14 = sadd.s32 1, %s10
    $region7: #{tpu_custom_call.1} parent=1 // loop_footer_branch
      %9 = sbr.rel target = $region3
    $region8: #{tpu_custom_call.1} parent=1 // loop_exit
      _
    %436 = vsyncpa [#allocation3], 1
    %s437 = scalar_lea.sflag [#allocation3], 1
    %438 = vsyncpa %s437, 1

</llo_original>
